<compile_context>
chip_gen: v6e
topology: v6e:2x2x1
jax: 0.10.0
libtpu: 0.0.40
codegen_flags: <defaults>
</compile_context>

<pallas_src>
import math
import numpy as np

import jax
import jax.numpy as jnp
from jax.experimental import pallas as pl
from jax.experimental.pallas import tpu as pltpu

BN_EPS = 1e-5
BN_SCALE = 1.0 / math.sqrt(1.0 + BN_EPS)
# All block working-sets in this net are < ~10 MiB; 32 MiB is safe on
# v5e/v6e (128 MiB physical) and leaves headroom on v7x (64 MiB physical).
VMEM_LIMIT = 32 * 1024 * 1024


def _pick_tile(dim: int, target: int, align: int) -> int:
    """Largest `align`-aligned divisor of `dim` that is <= target, or the full
    dim (full-extent blocks are always layout-legal)."""
    if dim <= target:
        return dim
    t = (target // align) * align
    while t >= align:
        if dim % t == 0:
            return t
        t -= align
    return dim


# ----------------------------------------------------------------------------
# Kernel 1: generic tiled matmul with fused epilogue
#   y = [ReLU]( x @ w  [+ bias] [+ residual] )
#   Used for every 1x1 conv, the im2col'd KxK convs, and the two upsample
#   matmuls.  bf16 (or f32) operands on the MXU, f32 accumulation.
#   nk==1 fast path: no scratch accumulator, 2-D grid, single store.
# ----------------------------------------------------------------------------
def matmul_fused(x, w, *, bias=None, residual=None, relu=True,
                 out_dtype=jnp.bfloat16,
                 tm_target=512, tn_target=2048, tk_target=2048):
    M, K = x.shape
    K2, N = w.shape
    assert K == K2
    # Guard sublane alignment of M (review correctness concern); no-op for the
    # shapes this network produces.
    Mp = ((M + 7) // 8) * 8
    if Mp != M:
        x = jnp.pad(x, ((0, Mp - M), (0, 0)))
        if residual is not None:
            residual = jnp.pad(residual, ((0, Mp - M), (0, 0)))

    tm = _pick_tile(Mp, tm_target, 8)
    tn = _pick_tile(N, tn_target, 128)
    tk = _pick_tile(K, tk_target, 128)
    nk = K // tk
    has_bias = bias is not None
    has_res = residual is not None

    def epilogue(y, b_ref, r_ref):
        if has_bias:
            y = y + b_ref[...].astype(jnp.float32)
        if has_res:
            y = y + r_ref[...].astype(jnp.float32)
        if relu:
            y = jnp.maximum(y, 0.0)
        return y

    inputs = [x, w]

    if nk == 1:
        # Single-step reduction: write the dot straight to the output block.
        in_specs = [pl.BlockSpec((tm, tk), lambda i, j: (i, 0)),
                    pl.BlockSpec((tk, tn), lambda i, j: (0, j))]
        if has_bias:
            in_specs.append(pl.BlockSpec((1, tn), lambda i, j: (0, j)))
            inputs.append(bias.reshape(1, N).astype(jnp.float32))
        if has_res:
            in_specs.append(pl.BlockSpec((tm, tn), lambda i, j: (i, j)))
            inputs.append(residual)

        def kernel(*refs):
            x_ref, w_ref = refs[0], refs[1]
            idx = 2
            b_ref = None
            r_ref = None
            if has_bias:
                b_ref = refs[idx]
                idx += 1
            if has_res:
                r_ref = refs[idx]
                idx += 1
            o_ref = refs[idx]
            y = jnp.dot(x_ref[...], w_ref[...],
                        preferred_element_type=jnp.float32)
            o_ref[...] = epilogue(y, b_ref, r_ref).astype(o_ref.dtype)

        out = pl.pallas_call(
            kernel,
            out_shape=jax.ShapeDtypeStruct((Mp, N), out_dtype),
            grid=(Mp // tm, N // tn),
            in_specs=in_specs,
            out_specs=pl.BlockSpec((tm, tn), lambda i, j: (i, j)),
            compiler_params=pltpu.CompilerParams(
                dimension_semantics=("parallel", "parallel"),
                vmem_limit_bytes=VMEM_LIMIT),
        )(*inputs)
    else:
        in_specs = [pl.BlockSpec((tm, tk), lambda i, j, k: (i, k)),
                    pl.BlockSpec((tk, tn), lambda i, j, k: (k, j))]
        if has_bias:
            in_specs.append(pl.BlockSpec((1, tn), lambda i, j, k: (0, j)))
            inputs.append(bias.reshape(1, N).astype(jnp.float32))
        if has_res:
            in_specs.append(pl.BlockSpec((tm, tn), lambda i, j, k: (i, j)))
            inputs.append(residual)

        def kernel(*refs):
            x_ref, w_ref = refs[0], refs[1]
            idx = 2
            b_ref = None
            r_ref = None
            if has_bias:
                b_ref = refs[idx]
                idx += 1
            if has_res:
                r_ref = refs[idx]
                idx += 1
            o_ref = refs[idx]
            acc_ref = refs[idx + 1]

            @pl.when(pl.program_id(2) == 0)
            def _():
                acc_ref[...] = jnp.zeros_like(acc_ref)

            acc_ref[...] += jnp.dot(x_ref[...], w_ref[...],
                                    preferred_element_type=jnp.float32)

            @pl.when(pl.program_id(2) == nk - 1)
            def _():
                o_ref[...] = epilogue(acc_ref[...], b_ref,
                                      r_ref).astype(o_ref.dtype)

        out = pl.pallas_call(
            kernel,
            out_shape=jax.ShapeDtypeStruct((Mp, N), out_dtype),
            grid=(Mp // tm, N // tn, nk),
            in_specs=in_specs,
            out_specs=pl.BlockSpec((tm, tn), lambda i, j, k: (i, j)),
            scratch_shapes=[pltpu.VMEM((tm, tn), jnp.float32)],
            compiler_params=pltpu.CompilerParams(
                dimension_semantics=("parallel", "parallel", "arbitrary"),
                vmem_limit_bytes=VMEM_LIMIT),
        )(*inputs)

    return out if Mp == M else out[:M]


def conv1x1(x_nhwc, w_oi, *, bn=True, relu=True, residual=None, bias=None):
    """1x1 conv (+folded BN) (+residual) (+bias) (+ReLU) as a Pallas matmul."""
    N, H, W, Cin = x_nhwc.shape
    Cout = w_oi.shape[0]
    w = jnp.transpose(w_oi, (1, 0))                       # (Cin, Cout)
    if bn:
        w = w * BN_SCALE
    x2 = x_nhwc.reshape(N * H * W, Cin).astype(jnp.bfloat16)
    r2 = (residual.reshape(N * H * W, Cout).astype(jnp.bfloat16)
          if residual is not None else None)
    y = matmul_fused(x2, w.astype(jnp.bfloat16),
                     bias=bias, residual=r2, relu=relu)
    return y.reshape(N, H, W, Cout)


# ----------------------------------------------------------------------------
# KxK conv via im2col + one big matmul (stride folded into the patch gather).
# Used for the 7x7/2 stem (K = 147) and the two strided 3x3 convs (K = 9*Cin),
# per review: stride-2 computed directly (no 4x over-compute) and a deep MXU
# contraction instead of K=3/Cin-only taps.
# The patch gather / pad are wrapper-side data movement (bf16, small); all
# FLOPs stay in the Pallas matmul.
# ----------------------------------------------------------------------------
def conv_kxk_im2col(x_nhwc, w_oihw, *, stride, padding, dilation=1, relu=True):
    N, H, W, Cin = x_nhwc.shape
    Cout, _, KH, KW = w_oihw.shape
    Ho = (H + 2 * padding - dilation * (KH - 1) - 1) // stride + 1
    Wo = (W + 2 * padding - dilation * (KW - 1) - 1) // stride + 1
    xp = jnp.pad(x_nhwc.astype(jnp.bfloat16),
                 ((0, 0), (padding, padding), (padding, padding), (0, 0)))
    taps = []
    for kh in range(KH):
        for kw in range(KW):
            h0, w0 = kh * dilation, kw * dilation
            taps.append(jax.lax.slice(
                xp, (0, h0, w0, 0),
                (N, h0 + (Ho - 1) * stride + 1, w0 + (Wo - 1) * stride + 1,
                 Cin),
                (1, stride, stride, 1)))
    patches = jnp.concatenate(taps, axis=-1).reshape(N * Ho * Wo, KH * KW * Cin)
    wm = (jnp.transpose(w_oihw, (2, 3, 1, 0)).reshape(KH * KW * Cin, Cout)
          * BN_SCALE)
    y = matmul_fused(patches, wm.astype(jnp.bfloat16), relu=relu)
    return y.reshape(N, Ho, Wo, Cout)


# ----------------------------------------------------------------------------
# Kernel 2: stride-1 KxK spatial conv (arbitrary dilation) + folded BN + ReLU
#   One image per grid step (Cout tiled on the second grid axis): KH*KW
#   shifted MXU dots accumulated in a loop-carried f32 value, bf16 in/out.
# ----------------------------------------------------------------------------
def conv_spatial_bn(x_nhwc, w_oihw, *, padding, dilation=1, relu=True,
                    tn_target=512):
    N, H, W, Cin = x_nhwc.shape
    Cout, _, KH, KW = w_oihw.shape
    Hp, Wp = H + 2 * padding, W + 2 * padding
    Ho = Hp - dilation * (KH - 1)
    Wo = Wp - dilation * (KW - 1)
    tn = _pick_tile(Cout, tn_target, 128)

    w = (jnp.transpose(w_oihw, (2, 3, 1, 0)) * BN_SCALE).astype(jnp.bfloat16)
    xp = jnp.pad(x_nhwc.astype(jnp.bfloat16),
                 ((0, 0), (padding, padding), (padding, padding), (0, 0)))

    def kernel(xp_ref, w_ref, o_ref):
        xp_v = xp_ref[...]
        # Loop-carried accumulator (no per-tap VMEM read/modify/write).
        acc = jnp.zeros((Ho * Wo, tn), jnp.float32)
        for kh in range(KH):
            for kw in range(KW):
                patch = xp_v[kh * dilation:kh * dilation + Ho,
                             kw * dilation:kw * dilation + Wo, :]
                acc = acc + jnp.dot(patch.reshape(Ho * Wo, Cin),
                                    w_ref[kh, kw],
                                    preferred_element_type=jnp.float32)
        if relu:
            acc = jnp.maximum(acc, 0.0)
        o_ref[...] = acc.astype(o_ref.dtype)

    out = pl.pallas_call(
        kernel,
        out_shape=jax.ShapeDtypeStruct((N, Ho * Wo, Cout), jnp.bfloat16),
        grid=(N, Cout // tn),
        in_specs=[
            pl.BlockSpec((None, Hp, Wp, Cin), lambda n, j: (n, 0, 0, 0)),
            pl.BlockSpec((KH, KW, Cin, tn), lambda n, j: (0, 0, 0, j)),
        ],
        out_specs=pl.BlockSpec((None, Ho * Wo, tn), lambda n, j: (n, 0, j)),
        compiler_params=pltpu.CompilerParams(
            dimension_semantics=("parallel", "parallel"),
            vmem_limit_bytes=VMEM_LIMIT),
    )(xp, w)
    return out.reshape(N, Ho, Wo, Cout)


# ----------------------------------------------------------------------------
# Kernel 3: MaxPool2d(kernel=3, stride=2, padding=1)
#   The 9 stride-2 taps are gathered wrapper-side (cheap strided slices of a
#   bf16 tensor); the kernel is a single VPU max-reduce with quarter-size
#   (stride-2) writeback — no full-res temp and no wrapper subsample pass.
# ----------------------------------------------------------------------------
def maxpool_3x3_s2_p1(x_nhwc):
    N, H, W, C = x_nhwc.shape
    Ho = (H + 2 - 3) // 2 + 1
    Wo = (W + 2 - 3) // 2 + 1
    neg = float(jnp.finfo(jnp.float32).min)
    xp = jnp.pad(x_nhwc, ((0, 0), (1, 1), (1, 1), (0, 0)),
                 constant_values=neg)
    taps = []
    for kh in range(3):
        for kw in range(3):
            taps.append(jax.lax.slice(
                xp, (0, kh, kw, 0),
                (N, kh + (Ho - 1) * 2 + 1, kw + (Wo - 1) * 2 + 1, C),
                (1, 2, 2, 1)))
    stacked = jnp.stack(taps, axis=1).reshape(N, 9 * Ho, Wo, C)

    def kernel(t_ref, o_ref):
        r = t_ref[0:Ho]
        for k in range(1, 9):
            r = jnp.maximum(r, t_ref[k * Ho:(k + 1) * Ho])
        o_ref[...] = r.astype(o_ref.dtype)

    return pl.pallas_call(
        kernel,
        out_shape=jax.ShapeDtypeStruct((N, Ho, Wo, C), x_nhwc.dtype),
        grid=(N,),
        in_specs=[pl.BlockSpec((None, 9 * Ho, Wo, C),
                               lambda n: (n, 0, 0, 0))],
        out_specs=pl.BlockSpec((None, Ho, Wo, C), lambda n: (n, 0, 0, 0)),
        compiler_params=pltpu.CompilerParams(
            dimension_semantics=("parallel",),
            vmem_limit_bytes=VMEM_LIMIT),
    )(stacked)


# ----------------------------------------------------------------------------
# Bilinear upsample, align_corners=True (nn.functional.upsample_bilinear),
# separable: rows then columns as two Pallas matmuls (no Kronecker matrix).
# Returns (N, out_h, C, out_w); caller transposes to NCHW.
# ----------------------------------------------------------------------------
def _upsample_matrix(size_in: int, size_out: int) -> np.ndarray:
    A = np.zeros((size_out, size_in), np.float32)
    if size_in == 1:
        A[:, 0] = 1.0
        return A
    for i in range(size_out):
        src = i * (size_in - 1) / (size_out - 1) if size_out > 1 else 0.0
        lo = min(int(math.floor(src)), size_in - 2)
        frac = src - lo
        A[i, lo] = 1.0 - frac
        A[i, lo + 1] = frac
    return A


def upsample_bilinear_align_corners(x_nhwc, out_h, out_w):
    N, h, w, C = x_nhwc.shape
    Uh = jnp.asarray(_upsample_matrix(h, out_h))          # (out_h, h)
    UwT = jnp.asarray(_upsample_matrix(w, out_w).T)       # (w, out_w)

    # Rows: T[i, (n, b, c)] = sum_a Uh[i, a] * x[n, a, b, c]
    xr = jnp.transpose(x_nhwc, (1, 0, 2, 3)).reshape(h, N * w * C)
    T = matmul_fused(Uh, xr.astype(jnp.float32), relu=False,
                     out_dtype=jnp.float32)               # (out_h, N*w*C)

    # Cols: Out[(n, i, c), j] = sum_b T[n, i, b, c] * Uw[j, b]
    T2 = jnp.transpose(T.reshape(out_h, N, w, C),
                       (1, 0, 3, 2)).reshape(N * out_h * C, w)
    O = matmul_fused(T2, UwT, relu=False, out_dtype=jnp.float32,
                     tm_target=8192)                      # (N*out_h*C, out_w)
    return O.reshape(N, out_h, C, out_w)


# ----------------------------------------------------------------------------
# ResNet-101 (output_stride=16) structure
# ----------------------------------------------------------------------------
def bottleneck_forward(x, bp):
    stride, dil = bp["stride"], bp["dilation"]
    out = conv1x1(x, bp["w1"], relu=True)                            # 1x1+BN+ReLU
    if stride > 1:
        # strided 3x3 computed directly at stride 2 via im2col + one matmul
        out = conv_kxk_im2col(out, bp["w2"], stride=stride, padding=dil,
                              dilation=dil, relu=True)
    else:
        out = conv_spatial_bn(out, bp["w2"], padding=dil, dilation=dil,
                              relu=True)                             # 3x3+BN+ReLU
    if bp["wd"] is not None:
        idn = x[:, ::stride, ::stride, :] if stride > 1 else x
        identity = conv1x1(idn, bp["wd"], relu=False)                # downsample
    else:
        identity = x
    # conv3 + BN + residual add + ReLU fused into one matmul kernel epilogue.
    return conv1x1(out, bp["w3"], relu=True, residual=identity)


def init_params(key, num_classes=21):
    keys = iter(jax.random.split(key, 256))

    def conv_w(cout, cin, k):
        std = math.sqrt(2.0 / (k * k * cout))          # PyTorch resnet init
        return std * jax.random.normal(next(keys), (cout, cin, k, k),
                                       jnp.float32)

    def conv_w1(cout, cin):
        return conv_w(cout, cin, 1)[:, :, 0, 0]

    params = {"conv1": conv_w(64, 3, 7)}
    layers_cfg = [(64, 3, 1), (128, 4, 2), (256, 23, 2), (512, 3, 2)]
    inplanes, current_stride, current_dilation, output_stride = 64, 4, 1, 16
    layers = []
    for planes, blocks, stride in layers_cfg:
        blks = []
        for b in range(blocks):
            s = stride if b == 0 else 1
            wd = None
            if b == 0 and (s != 1 or inplanes != planes * 4):
                if current_stride == output_stride:
                    current_dilation *= s       # dilate instead of subsample
                    s = 1
                else:
                    current_stride *= s
                wd = conv_w1(planes * 4, inplanes)
            blks.append({
                "w1": conv_w1(planes, inplanes),
                "w2": conv_w(planes, planes, 3),
                "w3": conv_w1(planes * 4, planes),
                "wd": wd,
                "stride": s,
                "dilation": current_dilation,
            })
            inplanes = planes * 4
        layers.append(blks)
    params["layers"] = layers
    # fc = nn.Conv2d(2048, num_classes, 1), weight ~ N(0, 0.01), bias = 0
    params["fc_w"] = 0.01 * jax.random.normal(next(keys),
                                              (num_classes, 512 * 4),
                                              jnp.float32)
    params["fc_b"] = jnp.zeros((num_classes,), jnp.float32)
    return params


def resnet101_16s_forward(x_nchw, params):
    N, _, H, W = x_nchw.shape
    nc = params["fc_w"].shape[0]
    x = jnp.transpose(x_nchw, (0, 2, 3, 1)).astype(jnp.bfloat16)  # NHWC bf16

    # Stem: 7x7/2 conv + BN + ReLU (im2col, K = 147), 3x3/2 maxpool.
    x = conv_kxk_im2col(x, params["conv1"], stride=2, padding=3, relu=True)
    x = maxpool_3x3_s2_p1(x)

    # Residual stages (layer1..layer4, layer4 dilated for output_stride=16).
    for layer in params["layers"]:
        for bp in layer:
            x = bottleneck_forward(x, bp)

    # Fully-convolutional classifier: 1x1 conv with bias, no BN/ReLU.
    # Lane-dense: pad classes up to a multiple of 128, slice at the very end.
    nc_pad = max(128, ((nc + 127) // 128) * 128)
    fc_w = jnp.pad(params["fc_w"], ((0, nc_pad - nc), (0, 0)))
    fc_b = jnp.pad(params["fc_b"], ((0, nc_pad - nc),))
    logits = conv1x1(x, fc_w, bn=False, relu=False, bias=fc_b)

    # upsample_bilinear(size=input spatial dims), align_corners=True.
    up = upsample_bilinear_align_corners(logits, H, W)    # (N, H, nc_pad, W)
    out = jnp.transpose(up, (0, 2, 1, 3))[:, :nc]         # NCHW, real classes
    return out


if __name__ == "__main__":
    key = jax.random.PRNGKey(0)
    k_x, k_p = jax.random.split(key)

    N, H, W = 2, 64, 64
    NUM_CLASSES = 21
    x = jax.random.normal(k_x, (N, 3, H, W), jnp.float32)
    params = init_params(k_p, NUM_CLASSES)

    out = resnet101_16s_forward(x, params)
    out = jax.block_until_ready(out)
    assert out.shape == (N, NUM_CLASSES, H, W), out.shape
    assert bool(jnp.all(jnp.isfinite(out)))
    print("KERNEL_OK")
</pallas_src>

<mosaic_0001>
module attributes {stable_mosaic.version = 11 : i64} {
  func.func @kernel(%arg0: i32, %arg1: i32, %arg2: memref<512x147xbf16, #tpu.memory_space<vmem>>, %arg3: memref<147x64xbf16, #tpu.memory_space<vmem>>, %arg4: memref<512x64xbf16, #tpu.memory_space<vmem>>) attributes {dimension_semantics = [#tpu.dimension_semantics<parallel>, #tpu.dimension_semantics<parallel>], iteration_bounds = array<i64: 4, 1>, scalar_prefetch = 0 : i64, scratch_operands = 0 : i64, tpu.core_type = #tpu.core_type<tc>, window_params = [{transform_indices = @transform_0, window_bounds = array<i64: 512, 147>}, {transform_indices = @transform_1, window_bounds = array<i64: 147, 64>}, {transform_indices = @transform_2, window_bounds = array<i64: 512, 64>}]} {
    %c0 = arith.constant 0 : index
    %c0_0 = arith.constant 0 : index
    %0 = vector.load %arg2[%c0, %c0_0] : memref<512x147xbf16, #tpu.memory_space<vmem>>, vector<512x147xbf16>
    %c0_1 = arith.constant 0 : index
    %c0_2 = arith.constant 0 : index
    %1 = vector.load %arg3[%c0_1, %c0_2] : memref<147x64xbf16, #tpu.memory_space<vmem>>, vector<147x64xbf16>
    %cst = arith.constant dense<0.000000e+00> : vector<512x64xf32>
    %2 = tpu.matmul %0, %1, %cst {dimension_numbers = #tpu.dot_dimension_numbers<[1], [0], [0], [1], [0, 0, 1, 1], [], []>} : vector<512x147xbf16>, vector<147x64xbf16>, vector<512x64xf32> -> vector<512x64xf32>
    %cst_3 = arith.constant 0.000000e+00 : f32
    %3 = vector.broadcast %cst_3 : f32 to vector<512x64xf32>
    %4 = arith.maximumf %2, %3 : vector<512x64xf32>
    %5 = arith.truncf %4 : vector<512x64xf32> to vector<512x64xbf16>
    %c0_4 = arith.constant 0 : index
    %c0_5 = arith.constant 0 : index
    %6 = vector.load %arg4[%c0_4, %c0_5] : memref<512x64xbf16, #tpu.memory_space<vmem>>, vector<512x64xbf16>
    tpu.vector_store %arg4[%c0_4, %c0_5], %5 {strides = array<i32>} : memref<512x64xbf16, #tpu.memory_space<vmem>>, vector<512x64xbf16>,
    return
  }
  func.func @transform_0(%arg0: i32, %arg1: i32) -> (i32, i32) {
    %c0_i32 = arith.constant 0 : i32
    %c0_i32_0 = arith.constant 0 : i32
    return %arg0, %c0_i32 : i32, i32
  }
  func.func @transform_1(%arg0: i32, %arg1: i32) -> (i32, i32) {
    %c0_i32 = arith.constant 0 : i32
    %c0_i32_0 = arith.constant 0 : i32
    return %c0_i32, %arg1 : i32, i32
  }
  func.func @transform_2(%arg0: i32, %arg1: i32) -> (i32, i32) {
    %c0_i32 = arith.constant 0 : i32
    return %arg0, %arg1 : i32, i32
  }
}

</mosaic_0001>

<llo_original>
// kernel: tpu_custom_call.1
$region0: #{tpu_custom_call.1}
  #allocation0 [shape = 'u32[]', space=smem, size = 0x4, offset = 0x4, fixed_abs, tag = 'smem constant byte address 0x4 - core index']
  #allocation1 [shape = 'u32[144,128]{1,0:T(1,128)}', space=vmem, size = 0x12000, scoped, tag = 'internal scratch']
  %s0 = inlined_call_operand.vmem [shape: bf16[2048,147], index: 0, kind: input, shape index: {}]
  %s1 = inlined_call_operand.vmem [shape: bf16[147,64], index: 1, kind: input, shape index: {}]
  %s2 = inlined_call_operand.vmem [shape: bf16[2048,64], index: 2, kind: output, shape index: {}]
  %s3 = sld [smem:[#allocation0]]
  $region41: #{tpu_custom_call.1} parent=0
    _
  %s5 = ssub.s32 1, %s3
  %s6 = scalar_select 0, %s5, %s3
  loop: start=0, step=1, limit=6
  $region2: #{tpu_custom_call.1} parent=0 // loop_pre_header
    _
  $region3: #{tpu_custom_call.1} parent=0 // loop_header
    %s8 = sphi 0, %s12
    %p9 = scmp.ge.s32.totalorder %s8, 6
    %s15 = sphi 0, %s27
    %s16 = sphi 0, %s23
    %s17 = sphi 0, %s15
    %s18 = sphi 0, %s16
    %s19 = sphi 0, %s17
    %s20 = sphi 0, %s18
    %s30 = sphi 0, %s32
    %s33 = sphi 0, %s30
    %s34 = sphi 0, %s33
    %s50 = sphi 0, %s34
    %s56 = sphi 0, %s58
    %s59 = sphi 0, %s56
    %s60 = sphi 0, %s59
    %s76 = sphi 0, %s60
    %s84 = sphi 0, %s86
    %s87 = sphi 0, %s84
    %s88 = sphi 0, %s87
    %s104 = sphi 0, %s88
  $region4: #{tpu_custom_call.1} parent=0 // loop_header_branch
    %11 = sbr.rel (%p9) target = $region8
  $region5: #{tpu_custom_call.1} parent=0 // loop_body
    %s13 = ssub.s32 %s8, 1
    %s14 = ssub.s32 %s8, 2
    %s21 = sadd.s32 1, %s16
    %p22 = scmp.ge.s32.totalorder %s21, 1
    %s23 = scalar_select %p22, 0, %s21
    %s24 = sadd.s32 1, %s15
    %s25 = scalar_select %p22, %s24, %s15
    %p26 = scmp.ge.s32.totalorder %s25, 4
    %s27 = scalar_select %p26, 0, %s25
    %s28 = ssub.s32 %s15, %s27
    %p29 = scmp.eq.s32.totalorder %s28, 0
    %s31 = sadd.s32 %s30, 1
    %s32 = scalar_select %p29, %s30, %s31
    %p35 = pneg %p29
    %p36 = scmp.eq.s32.totalorder %s8, 3
    %p37 = por %p35, %p36
    %p38 = scmp.ne.s32.totalorder %s30, %s33
    %p39 = scmp.eq.s32.totalorder %s8, 0
    %p40 = por %p38, %p39
    %p41 = scmp.ne.s32.totalorder %s30, %s33
    %p42 = scmp.eq.s32.totalorder %s13, 3
    %p43 = por %p41, %p42
    %p44 = scmp.ne.s32.totalorder %s33, %s34
    %p45 = scmp.eq.s32.totalorder %s13, 0
    %p46 = por %p44, %p45
    %p47 = scmp.ne.s32.totalorder %s33, %s34
    %p48 = scmp.eq.s32.totalorder %s14, 3
    %p49 = por %p47, %p48
    %p51 = scmp.ne.s32.totalorder %s34, %s50
    %p52 = scmp.eq.s32.totalorder %s14, 0
    %p53 = por %p51, %p52
    %s54 = ssub.s32 %s16, %s23
    %p55 = scmp.eq.s32.totalorder %s54, 0
    %s57 = sadd.s32 %s56, 1
    %s58 = scalar_select %p55, %s56, %s57
    %p61 = pneg %p55
    %p62 = scmp.eq.s32.totalorder %s8, 3
    %p63 = por %p61, %p62
    %p64 = scmp.ne.s32.totalorder %s56, %s59
    %p65 = scmp.eq.s32.totalorder %s8, 0
    %p66 = por %p64, %p65
    %p67 = scmp.ne.s32.totalorder %s56, %s59
    %p68 = scmp.eq.s32.totalorder %s13, 3
    %p69 = por %p67, %p68
    %p70 = scmp.ne.s32.totalorder %s59, %s60
    %p71 = scmp.eq.s32.totalorder %s13, 0
    %p72 = por %p70, %p71
    %p73 = scmp.ne.s32.totalorder %s59, %s60
    %p74 = scmp.eq.s32.totalorder %s14, 3
    %p75 = por %p73, %p74
    %p77 = scmp.ne.s32.totalorder %s60, %s76
    %p78 = scmp.eq.s32.totalorder %s14, 0
    %p79 = por %p77, %p78
    %s80 = ssub.s32 %s15, %s27
    %s81 = ssub.s32 %s16, %s23
    %s82 = sor.u32 %s80, %s81
    %p83 = scmp.eq.s32.totalorder %s82, 0
    %s85 = sadd.s32 %s84, 1
    %s86 = scalar_select %p83, %s84, %s85
    %p89 = pneg %p83
    %p90 = scmp.eq.s32.totalorder %s8, 3
    %p91 = por %p89, %p90
    %p92 = scmp.ne.s32.totalorder %s84, %s87
    %p93 = scmp.eq.s32.totalorder %s8, 0
    %p94 = por %p92, %p93
    %p95 = scmp.ne.s32.totalorder %s84, %s87
    %p96 = scmp.eq.s32.totalorder %s13, 3
    %p97 = por %p95, %p96
    %p98 = scmp.ne.s32.totalorder %s87, %s88
    %p99 = scmp.eq.s32.totalorder %s13, 0
    %p100 = por %p98, %p99
    %p101 = scmp.ne.s32.totalorder %s87, %s88
    %p102 = scmp.eq.s32.totalorder %s14, 3
    %p103 = por %p101, %p102
    %p105 = scmp.ne.s32.totalorder %s88, %s104
    %p106 = scmp.eq.s32.totalorder %s14, 0
    %p107 = por %p105, %p106
    %p108 = scmp.le.s32.totalorder 1, %s8
    %p109 = scmp.lt.s32.totalorder %s8, 5
    %p110 = pnand %p108, %p109
    %p111 = pneg %p110
    // Predicated region
    $region9: #{tpu_custom_call.1} parent=5 // pred_check
      _
    $region10: #{tpu_custom_call.1} parent=5 // pred_check_branch
      %113 = sbr.rel (%p110) target = $region12
    $region11: #{tpu_custom_call.1} parent=5 // pred_region
      %s114 = ssub.s32 %s8, 1
      // Predicated region
      $region13: #{tpu_custom_call.1} parent=11 // pred_check
        %p115 = pneg %p72
      $region14: #{tpu_custom_call.1} parent=11 // pred_check_branch
        %117 = sbr.rel (%p115) target = $region16
      $region15: #{tpu_custom_call.1} parent=11 // pred_region
        %p118 = scmp.lt.s32.totalorder %s18, 0
        %s119 = scalar_select %p118, %s18, 0
        %s120 = smul.addr %s119, 4
        %s121 = scalar_lea.vmem %s1, %s120
      $region16: #{tpu_custom_call.1} parent=11 // pred_fallthru
        _
    $region12: #{tpu_custom_call.1} parent=5 // pred_fallthru
      _
    %p122 = scmp.lt.s32.totalorder %s8, 4
    // Predicated region
    $region17: #{tpu_custom_call.1} parent=5 // pred_check
      %p123 = pneg %p122
    $region18: #{tpu_custom_call.1} parent=5 // pred_check_branch
      %125 = sbr.rel (%p123) target = $region20
    $region19: #{tpu_custom_call.1} parent=5 // pred_region
      // Predicated region
      $region21: #{tpu_custom_call.1} parent=19 // pred_check
        %p126 = pneg %p40
      $region22: #{tpu_custom_call.1} parent=19 // pred_check_branch
        %128 = sbr.rel (%p126) target = $region24
      $region23: #{tpu_custom_call.1} parent=19 // pred_region
        %s129 = smul.u32 64, %s15
        %p130 = scmp.lt.s32.totalorder %s129, 255
        %s131 = scalar_select %p130, %s129, 255
        %s132 = smul.addr %s131, 2
        %s133 = smul.addr %s132, 4
        %s134 = scalar_lea.vmem %s0, %s133
        %s135 = smul.u32 64, %s15
      $region24: #{tpu_custom_call.1} parent=19 // pred_fallthru
        _
    $region20: #{tpu_custom_call.1} parent=5 // pred_fallthru
      _
    %p136 = scmp.le.s32.totalorder 1, %s8
    %p137 = scmp.lt.s32.totalorder %s8, 5
    %p138 = pnand %p136, %p137
    %p139 = pneg %p138
    // Predicated region
    $region25: #{tpu_custom_call.1} parent=5 // pred_check
      _
    $region26: #{tpu_custom_call.1} parent=5 // pred_check_branch
      %141 = sbr.rel (%p138) target = $region28
    $region27: #{tpu_custom_call.1} parent=5 // pred_region
      %s142 = ssub.s32 %s8, 1
      %s143 = smul.u32 64, %s17
      %p144 = scmp.lt.s32.totalorder %s143, 255
      %s145 = scalar_select %p144, %s143, 255
      %s146 = smul.addr %s145, 2
      %s147 = smul.addr %s146, 4
      %s148 = scalar_lea.vmem %s0, %s147
      %p149 = pneg %p46
      %p150 = pneg %p43
      %p151 = scmp.lt.s32.totalorder %s18, 0
      %s152 = scalar_select %p151, %s18, 0
      %s153 = smul.addr %s152, 4
      %s154 = scalar_lea.vmem %s1, %s153
      %p155 = pneg %p72
      %p156 = pneg %p69
      %p157 = pneg %p100
      %p158 = pneg %p97
      %s159 = smul.u32 64, %s17
      %p160 = scmp.lt.s32.totalorder %s159, 255
      %s161 = scalar_select %p160, %s159, 255
      %p162 = scmp.lt.s32.totalorder %s18, 0
      %s163 = scalar_select %p162, %s18, 0
      %s164 = sadd.s32 %s163, %s161
      %s165 = smul.addr %s164, 4
      %s166 = scalar_lea.vmem %s2, %s165
      %s167 = smul.u32 64, %s17
      %p168 = scmp.lt.s32.totalorder %s167, 255
      %s169 = scalar_select %p168, %s167, 255
      %s170 = smul.addr %s169, 2
      %s171 = smul.addr %s170, 4
      %s172 = scalar_lea.vmem %s0, %s171
      %s173 = smul.u32 64, %s17
      %p174 = scmp.lt.s32.totalorder %s18, 0
      %s175 = scalar_select %p174, %s18, 0
      %s176 = smul.addr %s175, 4
      %s177 = scalar_lea.vmem %s1, %s176
      %s178 = smul.u32 64, %s17
      %p179 = scmp.lt.s32.totalorder %s178, 255
      %s180 = scalar_select %p179, %s178, 255
      %p181 = scmp.lt.s32.totalorder %s18, 0
      %s182 = scalar_select %p181, %s18, 0
      %s183 = sadd.s32 %s182, %s180
      %s184 = smul.addr %s183, 4
      %s185 = scalar_lea.vmem %s2, %s184
      %s186 = smul.u32 64, %s17
      %v188 = vld [vmem:[%s172] sm:$0xff]
      %v189 = vld [vmem:[%s172 + $0x8] sm:$0xff]
      %v190 = vld [vmem:[%s172 + $0x10] sm:$0xff]
      %v191 = vld [vmem:[%s172 + $0x18] sm:$0xff]
      %v192 = vld [vmem:[%s172 + $0x20] sm:$0xff]
      %v193 = vld [vmem:[%s172 + $0x28] sm:$0xff]
      %v194 = vld [vmem:[%s172 + $0x30] sm:$0xff]
      %v195 = vld [vmem:[%s172 + $0x38] sm:$0xff]
      %v196 = vld [vmem:[%s172 + $0x40] sm:$0xff]
      %v197 = vld [vmem:[%s172 + $0x48] sm:$0xff]
      %v198 = vld [vmem:[%s172 + $0x50] sm:$0xff]
      %v199 = vld [vmem:[%s172 + $0x58] sm:$0xff]
      %v200 = vld [vmem:[%s172 + $0x60] sm:$0xff]
      %v201 = vld [vmem:[%s172 + $0x68] sm:$0xff]
      %v202 = vld [vmem:[%s172 + $0x70] sm:$0xff]
      %v203 = vld [vmem:[%s172 + $0x78] sm:$0xff]
      %v204 = vld [vmem:[%s172 + $0x80] sm:$0xff]
      %v205 = vld [vmem:[%s172 + $0x88] sm:$0xff]
      %v206 = vld [vmem:[%s172 + $0x90] sm:$0xff]
      %v207 = vld [vmem:[%s172 + $0x98] sm:$0xff]
      %v208 = vld [vmem:[%s172 + $0xa0] sm:$0xff]
      %v209 = vld [vmem:[%s172 + $0xa8] sm:$0xff]
      %v210 = vld [vmem:[%s172 + $0xb0] sm:$0xff]
      %v211 = vld [vmem:[%s172 + $0xb8] sm:$0xff]
      %v212 = vld [vmem:[%s172 + $0xc0] sm:$0xff]
      %v213 = vld [vmem:[%s172 + $0xc8] sm:$0xff]
      %v214 = vld [vmem:[%s172 + $0xd0] sm:$0xff]
      %v215 = vld [vmem:[%s172 + $0xd8] sm:$0xff]
      %v216 = vld [vmem:[%s172 + $0xe0] sm:$0xff]
      %v217 = vld [vmem:[%s172 + $0xe8] sm:$0xff]
      %v218 = vld [vmem:[%s172 + $0xf0] sm:$0xff]
      %v219 = vld [vmem:[%s172 + $0xf8] sm:$0xff]
      %v220 = vld [vmem:[%s172 + $0x100] sm:$0xff]
      %v221 = vld [vmem:[%s172 + $0x108] sm:$0xff]
      %v222 = vld [vmem:[%s172 + $0x110] sm:$0xff]
      %v223 = vld [vmem:[%s172 + $0x118] sm:$0xff]
      %v224 = vld [vmem:[%s172 + $0x120] sm:$0xff]
      %v225 = vld [vmem:[%s172 + $0x128] sm:$0xff]
      %v226 = vld [vmem:[%s172 + $0x130] sm:$0xff]
      %v227 = vld [vmem:[%s172 + $0x138] sm:$0xff]
      %v228 = vld [vmem:[%s172 + $0x140] sm:$0xff]
      %v229 = vld [vmem:[%s172 + $0x148] sm:$0xff]
      %v230 = vld [vmem:[%s172 + $0x150] sm:$0xff]
      %v231 = vld [vmem:[%s172 + $0x158] sm:$0xff]
      %v232 = vld [vmem:[%s172 + $0x160] sm:$0xff]
      %v233 = vld [vmem:[%s172 + $0x168] sm:$0xff]
      %v234 = vld [vmem:[%s172 + $0x170] sm:$0xff]
      %v235 = vld [vmem:[%s172 + $0x178] sm:$0xff]
      %v236 = vld [vmem:[%s172 + $0x180] sm:$0xff]
      %v237 = vld [vmem:[%s172 + $0x188] sm:$0xff]
      %v238 = vld [vmem:[%s172 + $0x190] sm:$0xff]
      %v239 = vld [vmem:[%s172 + $0x198] sm:$0xff]
      %v240 = vld [vmem:[%s172 + $0x1a0] sm:$0xff]
      %v241 = vld [vmem:[%s172 + $0x1a8] sm:$0xff]
      %v242 = vld [vmem:[%s172 + $0x1b0] sm:$0xff]
      %v243 = vld [vmem:[%s172 + $0x1b8] sm:$0xff]
      %v244 = vld [vmem:[%s172 + $0x1c0] sm:$0xff]
      %v245 = vld [vmem:[%s172 + $0x1c8] sm:$0xff]
      %v246 = vld [vmem:[%s172 + $0x1d0] sm:$0xff]
      %v247 = vld [vmem:[%s172 + $0x1d8] sm:$0xff]
      %v248 = vld [vmem:[%s172 + $0x1e0] sm:$0xff]
      %v249 = vld [vmem:[%s172 + $0x1e8] sm:$0xff]
      %v250 = vld [vmem:[%s172 + $0x1f0] sm:$0xff]
      %v251 = vld [vmem:[%s172 + $0x1f8] sm:$0xff]
      %v252 = vld [vmem:[%s177] sm:$0xf]
      %v253 = vld [vmem:[%s177 + $0x4] sm:$0xf]
      %v254 = vld [vmem:[%s177 + $0x8] sm:$0xf]
      %v255 = vld [vmem:[%s177 + $0xc] sm:$0xf]
      %v256 = vld [vmem:[%s177 + $0x10] sm:$0xf]
      %v257 = vld [vmem:[%s177 + $0x14] sm:$0xf]
      %v258 = vld [vmem:[%s177 + $0x18] sm:$0xf]
      %v259 = vld [vmem:[%s177 + $0x1c] sm:$0xf]
      %v260 = vld [vmem:[%s177 + $0x20] sm:$0xf]
      %v261 = vld [vmem:[%s177 + $0x24] sm:$0xf]
      %v262 = vld [vmem:[%s177 + $0x28] sm:$0xf]
      %v263 = vld [vmem:[%s177 + $0x2c] sm:$0xf]
      %v264 = vld [vmem:[%s177 + $0x30] sm:$0xf]
      %v265 = vld [vmem:[%s177 + $0x34] sm:$0xf]
      %v266 = vld [vmem:[%s177 + $0x38] sm:$0xf]
      %v267 = vld [vmem:[%s177 + $0x3c] sm:$0xf]
      %v268 = vld [vmem:[%s177 + $0x40] sm:$0xf]
      %v269 = vld [vmem:[%s177 + $0x44] sm:$0xf]
      %v270 = vld [vmem:[%s177 + $0x48] sm:$0x3]
      %v335 = vunpack.c.l.b16 %v188
      %v336 = vunpack.c.h.b16 %v188
      %v337 = vunpack.c.l.b16 %v189
      %v338 = vunpack.c.h.b16 %v189
      %v339 = vunpack.c.l.b16 %v190
      %v340 = vunpack.c.h.b16 %v190
      %v341 = vunpack.c.l.b16 %v191
      %v342 = vunpack.c.h.b16 %v191
      %v343 = vunpack.c.l.b16 %v192
      %v344 = vunpack.c.h.b16 %v192
      %v345 = vunpack.c.l.b16 %v193
      %v346 = vunpack.c.h.b16 %v193
      %v347 = vunpack.c.l.b16 %v194
      %v348 = vunpack.c.h.b16 %v194
      %v349 = vunpack.c.l.b16 %v195
      %v350 = vunpack.c.h.b16 %v195
      %v351 = vunpack.c.l.b16 %v196
      %v352 = vunpack.c.h.b16 %v196
      %v353 = vunpack.c.l.b16 %v197
      %v354 = vunpack.c.h.b16 %v197
      %v355 = vunpack.c.l.b16 %v198
      %v356 = vunpack.c.h.b16 %v198
      %v357 = vunpack.c.l.b16 %v199
      %v358 = vunpack.c.h.b16 %v199
      %v359 = vunpack.c.l.b16 %v200
      %v360 = vunpack.c.h.b16 %v200
      %v361 = vunpack.c.l.b16 %v201
      %v362 = vunpack.c.h.b16 %v201
      %v363 = vunpack.c.l.b16 %v202
      %v364 = vunpack.c.h.b16 %v202
      %v365 = vunpack.c.l.b16 %v203
      %v366 = vunpack.c.h.b16 %v203
      %v367 = vunpack.c.l.b16 %v204
      %v368 = vunpack.c.h.b16 %v204
      %v369 = vunpack.c.l.b16 %v205
      %v370 = vunpack.c.h.b16 %v205
      %v371 = vunpack.c.l.b16 %v206
      %v372 = vunpack.c.h.b16 %v206
      %v373 = vunpack.c.l.b16 %v207
      %v374 = vunpack.c.h.b16 %v207
      %v375 = vunpack.c.l.b16 %v208
      %v376 = vunpack.c.h.b16 %v208
      %v377 = vunpack.c.l.b16 %v209
      %v378 = vunpack.c.h.b16 %v209
      %v379 = vunpack.c.l.b16 %v210
      %v380 = vunpack.c.h.b16 %v210
      %v381 = vunpack.c.l.b16 %v211
      %v382 = vunpack.c.h.b16 %v211
      %v383 = vunpack.c.l.b16 %v212
      %v384 = vunpack.c.h.b16 %v212
      %v385 = vunpack.c.l.b16 %v213
      %v386 = vunpack.c.h.b16 %v213
      %v387 = vunpack.c.l.b16 %v214
      %v388 = vunpack.c.h.b16 %v214
      %v389 = vunpack.c.l.b16 %v215
      %v390 = vunpack.c.h.b16 %v215
      %v391 = vunpack.c.l.b16 %v216
      %v392 = vunpack.c.h.b16 %v216
      %v393 = vunpack.c.l.b16 %v217
      %v394 = vunpack.c.h.b16 %v217
      %v395 = vunpack.c.l.b16 %v218
      %v396 = vunpack.c.h.b16 %v218
      %v397 = vunpack.c.l.b16 %v219
      %v398 = vunpack.c.h.b16 %v219
      %v399 = vunpack.c.l.b16 %v220
      %v400 = vunpack.c.h.b16 %v220
      %v401 = vunpack.c.l.b16 %v221
      %v402 = vunpack.c.h.b16 %v221
      %v403 = vunpack.c.l.b16 %v222
      %v404 = vunpack.c.h.b16 %v222
      %v405 = vunpack.c.l.b16 %v223
      %v406 = vunpack.c.h.b16 %v223
      %v407 = vunpack.c.l.b16 %v224
      %v408 = vunpack.c.h.b16 %v224
      %v409 = vunpack.c.l.b16 %v225
      %v410 = vunpack.c.h.b16 %v225
      %v411 = vunpack.c.l.b16 %v226
      %v412 = vunpack.c.h.b16 %v226
      %v413 = vunpack.c.l.b16 %v227
      %v414 = vunpack.c.h.b16 %v227
      %v415 = vunpack.c.l.b16 %v228
      %v416 = vunpack.c.h.b16 %v228
      %v417 = vunpack.c.l.b16 %v229
      %v418 = vunpack.c.h.b16 %v229
      %v419 = vunpack.c.l.b16 %v230
      %v420 = vunpack.c.h.b16 %v230
      %v421 = vunpack.c.l.b16 %v231
      %v422 = vunpack.c.h.b16 %v231
      %v423 = vunpack.c.l.b16 %v232
      %v424 = vunpack.c.h.b16 %v232
      %v425 = vunpack.c.l.b16 %v233
      %v426 = vunpack.c.h.b16 %v233
      %v427 = vunpack.c.l.b16 %v234
      %v428 = vunpack.c.h.b16 %v234
      %v429 = vunpack.c.l.b16 %v235
      %v430 = vunpack.c.h.b16 %v235
      %v431 = vunpack.c.l.b16 %v236
      %v432 = vunpack.c.h.b16 %v236
      %v433 = vunpack.c.l.b16 %v237
      %v434 = vunpack.c.h.b16 %v237
      %v435 = vunpack.c.l.b16 %v238
      %v436 = vunpack.c.h.b16 %v238
      %v437 = vunpack.c.l.b16 %v239
      %v438 = vunpack.c.h.b16 %v239
      %v439 = vunpack.c.l.b16 %v240
      %v440 = vunpack.c.h.b16 %v240
      %v441 = vunpack.c.l.b16 %v241
      %v442 = vunpack.c.h.b16 %v241
      %v443 = vunpack.c.l.b16 %v242
      %v444 = vunpack.c.h.b16 %v242
      %v445 = vunpack.c.l.b16 %v243
      %v446 = vunpack.c.h.b16 %v243
      %v447 = vunpack.c.l.b16 %v244
      %v448 = vunpack.c.h.b16 %v244
      %v449 = vunpack.c.l.b16 %v245
      %v450 = vunpack.c.h.b16 %v245
      %v451 = vunpack.c.l.b16 %v246
      %v452 = vunpack.c.h.b16 %v246
      %v453 = vunpack.c.l.b16 %v247
      %v454 = vunpack.c.h.b16 %v247
      %v455 = vunpack.c.l.b16 %v248
      %v456 = vunpack.c.h.b16 %v248
      %v457 = vunpack.c.l.b16 %v249
      %v458 = vunpack.c.h.b16 %v249
      %v459 = vunpack.c.l.b16 %v250
      %v460 = vunpack.c.h.b16 %v250
      %v461 = vunpack.c.l.b16 %v251
      %v462 = vunpack.c.h.b16 %v251
      %v463 = vpack.c.b16 %v337, %v335
      %v464 = vpack.c.b16 %v338, %v336
      %v465 = vpack.c.b16 %v341, %v339
      %v466 = vpack.c.b16 %v342, %v340
      %v467 = vpack.c.b16 %v345, %v343
      %v468 = vpack.c.b16 %v346, %v344
      %v469 = vpack.c.b16 %v349, %v347
      %v470 = vpack.c.b16 %v350, %v348
      %v471 = vpack.c.b16 %v353, %v351
      %v472 = vpack.c.b16 %v354, %v352
      %v473 = vpack.c.b16 %v357, %v355
      %v474 = vpack.c.b16 %v358, %v356
      %v475 = vpack.c.b16 %v361, %v359
      %v476 = vpack.c.b16 %v362, %v360
      %v477 = vpack.c.b16 %v365, %v363
      %v478 = vpack.c.b16 %v366, %v364
      %v479 = vpack.c.b16 %v369, %v367
      %v480 = vpack.c.b16 %v370, %v368
      %v481 = vpack.c.b16 %v373, %v371
      %v482 = vpack.c.b16 %v374, %v372
      %v483 = vpack.c.b16 %v377, %v375
      %v484 = vpack.c.b16 %v378, %v376
      %v485 = vpack.c.b16 %v381, %v379
      %v486 = vpack.c.b16 %v382, %v380
      %v487 = vpack.c.b16 %v385, %v383
      %v488 = vpack.c.b16 %v386, %v384
      %v489 = vpack.c.b16 %v389, %v387
      %v490 = vpack.c.b16 %v390, %v388
      %v491 = vpack.c.b16 %v393, %v391
      %v492 = vpack.c.b16 %v394, %v392
      %v493 = vpack.c.b16 %v397, %v395
      %v494 = vpack.c.b16 %v398, %v396
      %v495 = vpack.c.b16 %v401, %v399
      %v496 = vpack.c.b16 %v402, %v400
      %v497 = vpack.c.b16 %v405, %v403
      %v498 = vpack.c.b16 %v406, %v404
      %v499 = vpack.c.b16 %v409, %v407
      %v500 = vpack.c.b16 %v410, %v408
      %v501 = vpack.c.b16 %v413, %v411
      %v502 = vpack.c.b16 %v414, %v412
      %v503 = vpack.c.b16 %v417, %v415
      %v504 = vpack.c.b16 %v418, %v416
      %v505 = vpack.c.b16 %v421, %v419
      %v506 = vpack.c.b16 %v422, %v420
      %v507 = vpack.c.b16 %v425, %v423
      %v508 = vpack.c.b16 %v426, %v424
      %v509 = vpack.c.b16 %v429, %v427
      %v510 = vpack.c.b16 %v430, %v428
      %v511 = vpack.c.b16 %v433, %v431
      %v512 = vpack.c.b16 %v434, %v432
      %v513 = vpack.c.b16 %v437, %v435
      %v514 = vpack.c.b16 %v438, %v436
      %v515 = vpack.c.b16 %v441, %v439
      %v516 = vpack.c.b16 %v442, %v440
      %v517 = vpack.c.b16 %v445, %v443
      %v518 = vpack.c.b16 %v446, %v444
      %v519 = vpack.c.b16 %v449, %v447
      %v520 = vpack.c.b16 %v450, %v448
      %v521 = vpack.c.b16 %v453, %v451
      %v522 = vpack.c.b16 %v454, %v452
      %v523 = vpack.c.b16 %v457, %v455
      %v524 = vpack.c.b16 %v458, %v456
      %v525 = vpack.c.b16 %v461, %v459
      %v526 = vpack.c.b16 %v462, %v460
      %v578 = vunpack.c.l.b16 %v252
      %v579 = vunpack.c.l.b16 %v253
      %v580 = vunpack.c.l.b16 %v254
      %v581 = vunpack.c.l.b16 %v255
      %v582 = vunpack.c.l.b16 %v256
      %v583 = vunpack.c.l.b16 %v257
      %v584 = vunpack.c.l.b16 %v258
      %v585 = vunpack.c.l.b16 %v259
      %v586 = vunpack.c.l.b16 %v260
      %v587 = vunpack.c.l.b16 %v261
      %v588 = vunpack.c.l.b16 %v262
      %v589 = vunpack.c.l.b16 %v263
      %v590 = vunpack.c.l.b16 %v264
      %v591 = vunpack.c.l.b16 %v265
      %v592 = vunpack.c.l.b16 %v266
      %v593 = vunpack.c.l.b16 %v267
      %v594 = vunpack.c.l.b16 %v268
      %v595 = vunpack.c.l.b16 %v269
      %v596 = vunpack.c.l.b16 %v270
      %v597 = vpack.c.b16 %v579, %v578
      %v598 = vpack.c.b16 %v581, %v580
      %v599 = vpack.c.b16 %v583, %v582
      %v600 = vpack.c.b16 %v585, %v584
      %v601 = vpack.c.b16 %v587, %v586
      %v602 = vpack.c.b16 %v589, %v588
      %v603 = vpack.c.b16 %v591, %v590
      %v604 = vpack.c.b16 %v593, %v592
      %v605 = vpack.c.b16 %v595, %v594
      %v606 = vpack.c.b16 %v596, %v596
      %vm616 = vcmask 154624
      %v618 = vsel %vm616, %v464, 0
      %v621 = vsel %vm616, %v466, 0
      %v624 = vsel %vm616, %v468, 0
      %v627 = vsel %vm616, %v470, 0
      %v630 = vsel %vm616, %v472, 0
      %v633 = vsel %vm616, %v474, 0
      %v636 = vsel %vm616, %v476, 0
      %v639 = vsel %vm616, %v478, 0
      %v642 = vsel %vm616, %v480, 0
      %v645 = vsel %vm616, %v482, 0
      %v648 = vsel %vm616, %v484, 0
      %v651 = vsel %vm616, %v486, 0
      %v654 = vsel %vm616, %v488, 0
      %v657 = vsel %vm616, %v490, 0
      %v660 = vsel %vm616, %v492, 0
      %v663 = vsel %vm616, %v494, 0
      %v666 = vsel %vm616, %v496, 0
      %v669 = vsel %vm616, %v498, 0
      %v672 = vsel %vm616, %v500, 0
      %v675 = vsel %vm616, %v502, 0
      %v678 = vsel %vm616, %v504, 0
      %v681 = vsel %vm616, %v506, 0
      %v684 = vsel %vm616, %v508, 0
      %v687 = vsel %vm616, %v510, 0
      %v690 = vsel %vm616, %v512, 0
      %v693 = vsel %vm616, %v514, 0
      %v696 = vsel %vm616, %v516, 0
      %v699 = vsel %vm616, %v518, 0
      %v702 = vsel %vm616, %v520, 0
      %v705 = vsel %vm616, %v522, 0
      %v708 = vsel %vm616, %v524, 0
      %v711 = vsel %vm616, %v526, 0
      %vm713 = vcmask 1040384
      %vm714 = vcmask 1041408
      %v715 = vsel %vm713, 4294967295, 65535
      %v716 = vsel %vm714, %v715, 0
      %v718 = vand.u32 %v606, %v716
      %720 = vmatprep.subr.bf16.mxu0 0
      %721 = vmatpush1.bf16.msra.mxu0 %v604
      %722 = vmatprep.subr.bf16.mxu0 0
      %723 = vmatpush1.bf16.msra.mxu0 %v603
      %724 = vmatprep.subr.bf16.mxu0 0
      %725 = vmatpush1.bf16.msra.mxu0 %v602
      %726 = vmatprep.subr.bf16.mxu0 0
      %727 = vmatpush1.bf16.msra.mxu0 %v601
      %728 = vmatprep.subr.bf16.mxu0 0
      %729 = vmatpush1.bf16.msra.mxu0 %v600
      %730 = vmatprep.subr.bf16.mxu0 0
      %731 = vmatpush1.bf16.msra.mxu0 %v599
      %732 = vmatprep.subr.bf16.mxu0 0
      %733 = vmatpush1.bf16.msra.mxu0 %v598
      %734 = vmatprep.subr.bf16.mxu0 0
      %735 = vmatpush1.bf16.msra.mxu0 %v597
      %736 = vmatprep.subr.bf16.mxu0 0
      %737 = vmatpush2.bf16.msra.mxu0 0
      %738 = vmatprep.subr.bf16.mxu0 0
      %739 = vmatpush2.bf16.msra.mxu0 0
      %740 = vmatprep.subr.bf16.mxu0 0
      %741 = vmatpush2.bf16.msra.mxu0 0
      %742 = vmatprep.subr.bf16.mxu0 0
      %743 = vmatpush2.bf16.msra.mxu0 0
      %744 = vmatprep.subr.bf16.mxu0 0
      %745 = vmatpush2.bf16.msra.mxu0 0
      %746 = vmatprep.subr.bf16.mxu0 0
      %747 = vmatpush2.bf16.msra.mxu0 0
      %748 = vmatprep.subr.bf16.mxu0 0
      %749 = vmatpush2.bf16.msra.mxu0 %v718
      %750 = vmatprep.subr.bf16.mxu0 0
      %751 = vmatpush2.bf16.msra.mxu0 %v605
      %752 = vmatprep.mubr.bf16.mxu0 %v618
      %753 = vmatmul.mubr.bf16.gmra.mxu0 %v463
      %v754 = vpop.f32.mrf.mxu0
      %v755 = vadd.f32 0.0, %v754
      %v756 = vpop.f32.mrf.mxu0
      %v757 = vpop.f32.mrf.mxu0
      %v758 = vadd.f32 0.0, %v757
      %v759 = vpop.f32.mrf.mxu0
      %760 = vmatprep.mubr.bf16.mxu0 %v621
      %761 = vmatmul.mubr.bf16.gmra.mxu0 %v465
      %v762 = vpop.f32.mrf.mxu0
      %v763 = vadd.f32 0.0, %v762
      %v764 = vpop.f32.mrf.mxu0
      %v765 = vpop.f32.mrf.mxu0
      %v766 = vadd.f32 0.0, %v765
      %v767 = vpop.f32.mrf.mxu0
      %768 = vmatprep.mubr.bf16.mxu0 %v624
      %769 = vmatmul.mubr.bf16.gmra.mxu0 %v467
      %v770 = vpop.f32.mrf.mxu0
      %v771 = vadd.f32 0.0, %v770
      %v772 = vpop.f32.mrf.mxu0
      %v773 = vpop.f32.mrf.mxu0
      %v774 = vadd.f32 0.0, %v773
      %v775 = vpop.f32.mrf.mxu0
      %776 = vmatprep.mubr.bf16.mxu0 %v627
      %777 = vmatmul.mubr.bf16.gmra.mxu0 %v469
      %v778 = vpop.f32.mrf.mxu0
      %v779 = vadd.f32 0.0, %v778
      %v780 = vpop.f32.mrf.mxu0
      %v781 = vpop.f32.mrf.mxu0
      %v782 = vadd.f32 0.0, %v781
      %v783 = vpop.f32.mrf.mxu0
      %784 = vmatprep.mubr.bf16.mxu0 %v630
      %785 = vmatmul.mubr.bf16.gmra.mxu0 %v471
      %v786 = vpop.f32.mrf.mxu0
      %v787 = vadd.f32 0.0, %v786
      %v788 = vpop.f32.mrf.mxu0
      %v789 = vpop.f32.mrf.mxu0
      %v790 = vadd.f32 0.0, %v789
      %v791 = vpop.f32.mrf.mxu0
      %792 = vmatprep.mubr.bf16.mxu0 %v633
      %793 = vmatmul.mubr.bf16.gmra.mxu0 %v473
      %v794 = vpop.f32.mrf.mxu0
      %v795 = vadd.f32 0.0, %v794
      %v796 = vpop.f32.mrf.mxu0
      %v797 = vpop.f32.mrf.mxu0
      %v798 = vadd.f32 0.0, %v797
      %v799 = vpop.f32.mrf.mxu0
      %800 = vmatprep.mubr.bf16.mxu0 %v636
      %801 = vmatmul.mubr.bf16.gmra.mxu0 %v475
      %v802 = vpop.f32.mrf.mxu0
      %v803 = vadd.f32 0.0, %v802
      %v804 = vpop.f32.mrf.mxu0
      %v805 = vpop.f32.mrf.mxu0
      %v806 = vadd.f32 0.0, %v805
      %v807 = vpop.f32.mrf.mxu0
      %808 = vmatprep.mubr.bf16.mxu0 %v639
      %809 = vmatmul.mubr.bf16.gmra.mxu0 %v477
      %v810 = vpop.f32.mrf.mxu0
      %v811 = vadd.f32 0.0, %v810
      %v812 = vpop.f32.mrf.mxu0
      %v813 = vpop.f32.mrf.mxu0
      %v814 = vadd.f32 0.0, %v813
      %v815 = vpop.f32.mrf.mxu0
      %816 = vmatprep.mubr.bf16.mxu0 %v642
      %817 = vmatmul.mubr.bf16.gmra.mxu0 %v479
      %v818 = vpop.f32.mrf.mxu0
      %v819 = vadd.f32 0.0, %v818
      %v820 = vpop.f32.mrf.mxu0
      %v821 = vpop.f32.mrf.mxu0
      %v822 = vadd.f32 0.0, %v821
      %v823 = vpop.f32.mrf.mxu0
      %824 = vmatprep.mubr.bf16.mxu0 %v645
      %825 = vmatmul.mubr.bf16.gmra.mxu0 %v481
      %v826 = vpop.f32.mrf.mxu0
      %v827 = vadd.f32 0.0, %v826
      %v828 = vpop.f32.mrf.mxu0
      %v829 = vpop.f32.mrf.mxu0
      %v830 = vadd.f32 0.0, %v829
      %v831 = vpop.f32.mrf.mxu0
      %832 = vmatprep.mubr.bf16.mxu0 %v648
      %833 = vmatmul.mubr.bf16.gmra.mxu0 %v483
      %v834 = vpop.f32.mrf.mxu0
      %v835 = vadd.f32 0.0, %v834
      %v836 = vpop.f32.mrf.mxu0
      %v837 = vpop.f32.mrf.mxu0
      %v838 = vadd.f32 0.0, %v837
      %v839 = vpop.f32.mrf.mxu0
      %840 = vmatprep.mubr.bf16.mxu0 %v651
      %841 = vmatmul.mubr.bf16.gmra.mxu0 %v485
      %v842 = vpop.f32.mrf.mxu0
      %v843 = vadd.f32 0.0, %v842
      %v844 = vpop.f32.mrf.mxu0
      %v845 = vpop.f32.mrf.mxu0
      %v846 = vadd.f32 0.0, %v845
      %v847 = vpop.f32.mrf.mxu0
      %848 = vmatprep.mubr.bf16.mxu0 %v654
      %849 = vmatmul.mubr.bf16.gmra.mxu0 %v487
      %v850 = vpop.f32.mrf.mxu0
      %v851 = vadd.f32 0.0, %v850
      %v852 = vpop.f32.mrf.mxu0
      %v853 = vpop.f32.mrf.mxu0
      %v854 = vadd.f32 0.0, %v853
      %v855 = vpop.f32.mrf.mxu0
      %856 = vmatprep.mubr.bf16.mxu0 %v657
      %857 = vmatmul.mubr.bf16.gmra.mxu0 %v489
      %v858 = vpop.f32.mrf.mxu0
      %v859 = vadd.f32 0.0, %v858
      %v860 = vpop.f32.mrf.mxu0
      %v861 = vpop.f32.mrf.mxu0
      %v862 = vadd.f32 0.0, %v861
      %v863 = vpop.f32.mrf.mxu0
      %864 = vmatprep.mubr.bf16.mxu0 %v660
      %865 = vmatmul.mubr.bf16.gmra.mxu0 %v491
      %v866 = vpop.f32.mrf.mxu0
      %v867 = vadd.f32 0.0, %v866
      %v868 = vpop.f32.mrf.mxu0
      %v869 = vpop.f32.mrf.mxu0
      %v870 = vadd.f32 0.0, %v869
      %v871 = vpop.f32.mrf.mxu0
      %872 = vmatprep.mubr.bf16.mxu0 %v663
      %873 = vmatmul.mubr.bf16.gmra.mxu0 %v493
      %v874 = vpop.f32.mrf.mxu0
      %v875 = vadd.f32 0.0, %v874
      %v876 = vpop.f32.mrf.mxu0
      %v877 = vpop.f32.mrf.mxu0
      %v878 = vadd.f32 0.0, %v877
      %v879 = vpop.f32.mrf.mxu0
      %880 = vmatprep.mubr.bf16.mxu0 %v666
      %881 = vmatmul.mubr.bf16.gmra.mxu0 %v495
      %v882 = vpop.f32.mrf.mxu0
      %v883 = vadd.f32 0.0, %v882
      %v884 = vpop.f32.mrf.mxu0
      %v885 = vpop.f32.mrf.mxu0
      %v886 = vadd.f32 0.0, %v885
      %v887 = vpop.f32.mrf.mxu0
      %888 = vmatprep.mubr.bf16.mxu0 %v669
      %889 = vmatmul.mubr.bf16.gmra.mxu0 %v497
      %v890 = vpop.f32.mrf.mxu0
      %v891 = vadd.f32 0.0, %v890
      %v892 = vpop.f32.mrf.mxu0
      %v893 = vpop.f32.mrf.mxu0
      %v894 = vadd.f32 0.0, %v893
      %v895 = vpop.f32.mrf.mxu0
      %896 = vmatprep.mubr.bf16.mxu0 %v672
      %897 = vmatmul.mubr.bf16.gmra.mxu0 %v499
      %v898 = vpop.f32.mrf.mxu0
      %v899 = vadd.f32 0.0, %v898
      %v900 = vpop.f32.mrf.mxu0
      %v901 = vpop.f32.mrf.mxu0
      %v902 = vadd.f32 0.0, %v901
      %v903 = vpop.f32.mrf.mxu0
      %904 = vmatprep.mubr.bf16.mxu0 %v675
      %905 = vmatmul.mubr.bf16.gmra.mxu0 %v501
      %v906 = vpop.f32.mrf.mxu0
      %v907 = vadd.f32 0.0, %v906
      %v908 = vpop.f32.mrf.mxu0
      %v909 = vpop.f32.mrf.mxu0
      %v910 = vadd.f32 0.0, %v909
      %v911 = vpop.f32.mrf.mxu0
      %912 = vmatprep.mubr.bf16.mxu0 %v678
      %913 = vmatmul.mubr.bf16.gmra.mxu0 %v503
      %v914 = vpop.f32.mrf.mxu0
      %v915 = vadd.f32 0.0, %v914
      %v916 = vpop.f32.mrf.mxu0
      %v917 = vpop.f32.mrf.mxu0
      %v918 = vadd.f32 0.0, %v917
      %v919 = vpop.f32.mrf.mxu0
      %920 = vmatprep.mubr.bf16.mxu0 %v681
      %921 = vmatmul.mubr.bf16.gmra.mxu0 %v505
      %v922 = vpop.f32.mrf.mxu0
      %v923 = vadd.f32 0.0, %v922
      %v924 = vpop.f32.mrf.mxu0
      %v925 = vpop.f32.mrf.mxu0
      %v926 = vadd.f32 0.0, %v925
      %v927 = vpop.f32.mrf.mxu0
      %928 = vmatprep.mubr.bf16.mxu0 %v684
      %929 = vmatmul.mubr.bf16.gmra.mxu0 %v507
      %v930 = vpop.f32.mrf.mxu0
      %v931 = vadd.f32 0.0, %v930
      %v932 = vpop.f32.mrf.mxu0
      %v933 = vpop.f32.mrf.mxu0
      %v934 = vadd.f32 0.0, %v933
      %v935 = vpop.f32.mrf.mxu0
      %936 = vmatprep.mubr.bf16.mxu0 %v687
      %937 = vmatmul.mubr.bf16.gmra.mxu0 %v509
      %v938 = vpop.f32.mrf.mxu0
      %v939 = vadd.f32 0.0, %v938
      %v940 = vpop.f32.mrf.mxu0
      %v941 = vpop.f32.mrf.mxu0
      %v942 = vadd.f32 0.0, %v941
      %v943 = vpop.f32.mrf.mxu0
      %944 = vmatprep.mubr.bf16.mxu0 %v690
      %945 = vmatmul.mubr.bf16.gmra.mxu0 %v511
      %v946 = vpop.f32.mrf.mxu0
      %v947 = vadd.f32 0.0, %v946
      %v948 = vpop.f32.mrf.mxu0
      %v949 = vpop.f32.mrf.mxu0
      %v950 = vadd.f32 0.0, %v949
      %v951 = vpop.f32.mrf.mxu0
      %952 = vmatprep.mubr.bf16.mxu0 %v693
      %953 = vmatmul.mubr.bf16.gmra.mxu0 %v513
      %v954 = vpop.f32.mrf.mxu0
      %v955 = vadd.f32 0.0, %v954
      %v956 = vpop.f32.mrf.mxu0
      %v957 = vpop.f32.mrf.mxu0
      %v958 = vadd.f32 0.0, %v957
      %v959 = vpop.f32.mrf.mxu0
      %960 = vmatprep.mubr.bf16.mxu0 %v696
      %961 = vmatmul.mubr.bf16.gmra.mxu0 %v515
      %v962 = vpop.f32.mrf.mxu0
      %v963 = vadd.f32 0.0, %v962
      %v964 = vpop.f32.mrf.mxu0
      %v965 = vpop.f32.mrf.mxu0
      %v966 = vadd.f32 0.0, %v965
      %v967 = vpop.f32.mrf.mxu0
      %968 = vmatprep.mubr.bf16.mxu0 %v699
      %969 = vmatmul.mubr.bf16.gmra.mxu0 %v517
      %v970 = vpop.f32.mrf.mxu0
      %v971 = vadd.f32 0.0, %v970
      %v972 = vpop.f32.mrf.mxu0
      %v973 = vpop.f32.mrf.mxu0
      %v974 = vadd.f32 0.0, %v973
      %v975 = vpop.f32.mrf.mxu0
      %976 = vmatprep.mubr.bf16.mxu0 %v702
      %977 = vmatmul.mubr.bf16.gmra.mxu0 %v519
      %v978 = vpop.f32.mrf.mxu0
      %v979 = vadd.f32 0.0, %v978
      %v980 = vpop.f32.mrf.mxu0
      %v981 = vpop.f32.mrf.mxu0
      %v982 = vadd.f32 0.0, %v981
      %v983 = vpop.f32.mrf.mxu0
      %984 = vmatprep.mubr.bf16.mxu0 %v705
      %985 = vmatmul.mubr.bf16.gmra.mxu0 %v521
      %v986 = vpop.f32.mrf.mxu0
      %v987 = vadd.f32 0.0, %v986
      %v988 = vpop.f32.mrf.mxu0
      %v989 = vpop.f32.mrf.mxu0
      %v990 = vadd.f32 0.0, %v989
      %v991 = vpop.f32.mrf.mxu0
      %992 = vmatprep.mubr.bf16.mxu0 %v708
      %993 = vmatmul.mubr.bf16.gmra.mxu0 %v523
      %v994 = vpop.f32.mrf.mxu0
      %v995 = vadd.f32 0.0, %v994
      %v996 = vpop.f32.mrf.mxu0
      %v997 = vpop.f32.mrf.mxu0
      %v998 = vadd.f32 0.0, %v997
      %v999 = vpop.f32.mrf.mxu0
      %1000 = vmatprep.mubr.bf16.mxu0 %v711
      %1001 = vmatmul.mubr.bf16.gmra.mxu0 %v525
      %v1002 = vpop.f32.mrf.mxu0
      %v1003 = vadd.f32 0.0, %v1002
      %v1004 = vpop.f32.mrf.mxu0
      %v1005 = vpop.f32.mrf.mxu0
      %v1006 = vadd.f32 0.0, %v1005
      %v1007 = vpop.f32.mrf.mxu0
      %1008 = vdwg.mxu0
      %v1009 = vmax.f32 %v755, 0.0
      %v1010 = vmax.f32 %v758, 0.0
      %v1011 = vmax.f32 %v763, 0.0
      %v1012 = vmax.f32 %v766, 0.0
      %v1013 = vmax.f32 %v771, 0.0
      %v1014 = vmax.f32 %v774, 0.0
      %v1015 = vmax.f32 %v779, 0.0
      %v1016 = vmax.f32 %v782, 0.0
      %v1017 = vmax.f32 %v787, 0.0
      %v1018 = vmax.f32 %v790, 0.0
      %v1019 = vmax.f32 %v795, 0.0
      %v1020 = vmax.f32 %v798, 0.0
      %v1021 = vmax.f32 %v803, 0.0
      %v1022 = vmax.f32 %v806, 0.0
      %v1023 = vmax.f32 %v811, 0.0
      %v1024 = vmax.f32 %v814, 0.0
      %v1025 = vmax.f32 %v819, 0.0
      %v1026 = vmax.f32 %v822, 0.0
      %v1027 = vmax.f32 %v827, 0.0
      %v1028 = vmax.f32 %v830, 0.0
      %v1029 = vmax.f32 %v835, 0.0
      %v1030 = vmax.f32 %v838, 0.0
      %v1031 = vmax.f32 %v843, 0.0
      %v1032 = vmax.f32 %v846, 0.0
      %v1033 = vmax.f32 %v851, 0.0
      %v1034 = vmax.f32 %v854, 0.0
      %v1035 = vmax.f32 %v859, 0.0
      %v1036 = vmax.f32 %v862, 0.0
      %v1037 = vmax.f32 %v867, 0.0
      %v1038 = vmax.f32 %v870, 0.0
      %v1039 = vmax.f32 %v875, 0.0
      %v1040 = vmax.f32 %v878, 0.0
      %v1041 = vmax.f32 %v883, 0.0
      %v1042 = vmax.f32 %v886, 0.0
      %v1043 = vmax.f32 %v891, 0.0
      %v1044 = vmax.f32 %v894, 0.0
      %v1045 = vmax.f32 %v899, 0.0
      %v1046 = vmax.f32 %v902, 0.0
      %v1047 = vmax.f32 %v907, 0.0
      %v1048 = vmax.f32 %v910, 0.0
      %v1049 = vmax.f32 %v915, 0.0
      %v1050 = vmax.f32 %v918, 0.0
      %v1051 = vmax.f32 %v923, 0.0
      %v1052 = vmax.f32 %v926, 0.0
      %v1053 = vmax.f32 %v931, 0.0
      %v1054 = vmax.f32 %v934, 0.0
      %v1055 = vmax.f32 %v939, 0.0
      %v1056 = vmax.f32 %v942, 0.0
      %v1057 = vmax.f32 %v947, 0.0
      %v1058 = vmax.f32 %v950, 0.0
      %v1059 = vmax.f32 %v955, 0.0
      %v1060 = vmax.f32 %v958, 0.0
      %v1061 = vmax.f32 %v963, 0.0
      %v1062 = vmax.f32 %v966, 0.0
      %v1063 = vmax.f32 %v971, 0.0
      %v1064 = vmax.f32 %v974, 0.0
      %v1065 = vmax.f32 %v979, 0.0
      %v1066 = vmax.f32 %v982, 0.0
      %v1067 = vmax.f32 %v987, 0.0
      %v1068 = vmax.f32 %v990, 0.0
      %v1069 = vmax.f32 %v995, 0.0
      %v1070 = vmax.f32 %v998, 0.0
      %v1071 = vmax.f32 %v1003, 0.0
      %v1072 = vmax.f32 %v1006, 0.0
      %v1073 = vpack.c.bf16 %v1010, %v1009
      %v1074 = vpack.c.bf16 %v1012, %v1011
      %v1075 = vpack.c.bf16 %v1014, %v1013
      %v1076 = vpack.c.bf16 %v1016, %v1015
      %v1077 = vpack.c.bf16 %v1018, %v1017
      %v1078 = vpack.c.bf16 %v1020, %v1019
      %v1079 = vpack.c.bf16 %v1022, %v1021
      %v1080 = vpack.c.bf16 %v1024, %v1023
      %v1081 = vpack.c.bf16 %v1026, %v1025
      %v1082 = vpack.c.bf16 %v1028, %v1027
      %v1083 = vpack.c.bf16 %v1030, %v1029
      %v1084 = vpack.c.bf16 %v1032, %v1031
      %v1085 = vpack.c.bf16 %v1034, %v1033
      %v1086 = vpack.c.bf16 %v1036, %v1035
      %v1087 = vpack.c.bf16 %v1038, %v1037
      %v1088 = vpack.c.bf16 %v1040, %v1039
      %v1089 = vpack.c.bf16 %v1042, %v1041
      %v1090 = vpack.c.bf16 %v1044, %v1043
      %v1091 = vpack.c.bf16 %v1046, %v1045
      %v1092 = vpack.c.bf16 %v1048, %v1047
      %v1093 = vpack.c.bf16 %v1050, %v1049
      %v1094 = vpack.c.bf16 %v1052, %v1051
      %v1095 = vpack.c.bf16 %v1054, %v1053
      %v1096 = vpack.c.bf16 %v1056, %v1055
      %v1097 = vpack.c.bf16 %v1058, %v1057
      %v1098 = vpack.c.bf16 %v1060, %v1059
      %v1099 = vpack.c.bf16 %v1062, %v1061
      %v1100 = vpack.c.bf16 %v1064, %v1063
      %v1101 = vpack.c.bf16 %v1066, %v1065
      %v1102 = vpack.c.bf16 %v1068, %v1067
      %v1103 = vpack.c.bf16 %v1070, %v1069
      %v1104 = vpack.c.bf16 %v1072, %v1071
      %v1137 = vunpack.c.l.b16 %v1073
      %v1138 = vunpack.c.h.b16 %v1073
      %v1139 = vunpack.c.l.b16 %v1074
      %v1140 = vunpack.c.h.b16 %v1074
      %v1141 = vunpack.c.l.b16 %v1075
      %v1142 = vunpack.c.h.b16 %v1075
      %v1143 = vunpack.c.l.b16 %v1076
      %v1144 = vunpack.c.h.b16 %v1076
      %v1145 = vunpack.c.l.b16 %v1077
      %v1146 = vunpack.c.h.b16 %v1077
      %v1147 = vunpack.c.l.b16 %v1078
      %v1148 = vunpack.c.h.b16 %v1078
      %v1149 = vunpack.c.l.b16 %v1079
      %v1150 = vunpack.c.h.b16 %v1079
      %v1151 = vunpack.c.l.b16 %v1080
      %v1152 = vunpack.c.h.b16 %v1080
      %v1153 = vunpack.c.l.b16 %v1081
      %v1154 = vunpack.c.h.b16 %v1081
      %v1155 = vunpack.c.l.b16 %v1082
      %v1156 = vunpack.c.h.b16 %v1082
      %v1157 = vunpack.c.l.b16 %v1083
      %v1158 = vunpack.c.h.b16 %v1083
      %v1159 = vunpack.c.l.b16 %v1084
      %v1160 = vunpack.c.h.b16 %v1084
      %v1161 = vunpack.c.l.b16 %v1085
      %v1162 = vunpack.c.h.b16 %v1085
      %v1163 = vunpack.c.l.b16 %v1086
      %v1164 = vunpack.c.h.b16 %v1086
      %v1165 = vunpack.c.l.b16 %v1087
      %v1166 = vunpack.c.h.b16 %v1087
      %v1167 = vunpack.c.l.b16 %v1088
      %v1168 = vunpack.c.h.b16 %v1088
      %v1169 = vunpack.c.l.b16 %v1089
      %v1170 = vunpack.c.h.b16 %v1089
      %v1171 = vunpack.c.l.b16 %v1090
      %v1172 = vunpack.c.h.b16 %v1090
      %v1173 = vunpack.c.l.b16 %v1091
      %v1174 = vunpack.c.h.b16 %v1091
      %v1175 = vunpack.c.l.b16 %v1092
      %v1176 = vunpack.c.h.b16 %v1092
      %v1177 = vunpack.c.l.b16 %v1093
      %v1178 = vunpack.c.h.b16 %v1093
      %v1179 = vunpack.c.l.b16 %v1094
      %v1180 = vunpack.c.h.b16 %v1094
      %v1181 = vunpack.c.l.b16 %v1095
      %v1182 = vunpack.c.h.b16 %v1095
      %v1183 = vunpack.c.l.b16 %v1096
      %v1184 = vunpack.c.h.b16 %v1096
      %v1185 = vunpack.c.l.b16 %v1097
      %v1186 = vunpack.c.h.b16 %v1097
      %v1187 = vunpack.c.l.b16 %v1098
      %v1188 = vunpack.c.h.b16 %v1098
      %v1189 = vunpack.c.l.b16 %v1099
      %v1190 = vunpack.c.h.b16 %v1099
      %v1191 = vunpack.c.l.b16 %v1100
      %v1192 = vunpack.c.h.b16 %v1100
      %v1193 = vunpack.c.l.b16 %v1101
      %v1194 = vunpack.c.h.b16 %v1101
      %v1195 = vunpack.c.l.b16 %v1102
      %v1196 = vunpack.c.h.b16 %v1102
      %v1197 = vunpack.c.l.b16 %v1103
      %v1198 = vunpack.c.h.b16 %v1103
      %v1199 = vunpack.c.l.b16 %v1104
      %v1200 = vunpack.c.h.b16 %v1104
      %v1201 = vpack.c.b16 %v1137, %v1137
      %v1202 = vpack.c.b16 %v1138, %v1138
      %v1203 = vpack.c.b16 %v1139, %v1139
      %v1204 = vpack.c.b16 %v1140, %v1140
      %v1205 = vpack.c.b16 %v1141, %v1141
      %v1206 = vpack.c.b16 %v1142, %v1142
      %v1207 = vpack.c.b16 %v1143, %v1143
      %v1208 = vpack.c.b16 %v1144, %v1144
      %v1209 = vpack.c.b16 %v1145, %v1145
      %v1210 = vpack.c.b16 %v1146, %v1146
      %v1211 = vpack.c.b16 %v1147, %v1147
      %v1212 = vpack.c.b16 %v1148, %v1148
      %v1213 = vpack.c.b16 %v1149, %v1149
      %v1214 = vpack.c.b16 %v1150, %v1150
      %v1215 = vpack.c.b16 %v1151, %v1151
      %v1216 = vpack.c.b16 %v1152, %v1152
      %v1217 = vpack.c.b16 %v1153, %v1153
      %v1218 = vpack.c.b16 %v1154, %v1154
      %v1219 = vpack.c.b16 %v1155, %v1155
      %v1220 = vpack.c.b16 %v1156, %v1156
      %v1221 = vpack.c.b16 %v1157, %v1157
      %v1222 = vpack.c.b16 %v1158, %v1158
      %v1223 = vpack.c.b16 %v1159, %v1159
      %v1224 = vpack.c.b16 %v1160, %v1160
      %v1225 = vpack.c.b16 %v1161, %v1161
      %v1226 = vpack.c.b16 %v1162, %v1162
      %v1227 = vpack.c.b16 %v1163, %v1163
      %v1228 = vpack.c.b16 %v1164, %v1164
      %v1229 = vpack.c.b16 %v1165, %v1165
      %v1230 = vpack.c.b16 %v1166, %v1166
      %v1231 = vpack.c.b16 %v1167, %v1167
      %v1232 = vpack.c.b16 %v1168, %v1168
      %v1233 = vpack.c.b16 %v1169, %v1169
      %v1234 = vpack.c.b16 %v1170, %v1170
      %v1235 = vpack.c.b16 %v1171, %v1171
      %v1236 = vpack.c.b16 %v1172, %v1172
      %v1237 = vpack.c.b16 %v1173, %v1173
      %v1238 = vpack.c.b16 %v1174, %v1174
      %v1239 = vpack.c.b16 %v1175, %v1175
      %v1240 = vpack.c.b16 %v1176, %v1176
      %v1241 = vpack.c.b16 %v1177, %v1177
      %v1242 = vpack.c.b16 %v1178, %v1178
      %v1243 = vpack.c.b16 %v1179, %v1179
      %v1244 = vpack.c.b16 %v1180, %v1180
      %v1245 = vpack.c.b16 %v1181, %v1181
      %v1246 = vpack.c.b16 %v1182, %v1182
      %v1247 = vpack.c.b16 %v1183, %v1183
      %v1248 = vpack.c.b16 %v1184, %v1184
      %v1249 = vpack.c.b16 %v1185, %v1185
      %v1250 = vpack.c.b16 %v1186, %v1186
      %v1251 = vpack.c.b16 %v1187, %v1187
      %v1252 = vpack.c.b16 %v1188, %v1188
      %v1253 = vpack.c.b16 %v1189, %v1189
      %v1254 = vpack.c.b16 %v1190, %v1190
      %v1255 = vpack.c.b16 %v1191, %v1191
      %v1256 = vpack.c.b16 %v1192, %v1192
      %v1257 = vpack.c.b16 %v1193, %v1193
      %v1258 = vpack.c.b16 %v1194, %v1194
      %v1259 = vpack.c.b16 %v1195, %v1195
      %v1260 = vpack.c.b16 %v1196, %v1196
      %v1261 = vpack.c.b16 %v1197, %v1197
      %v1262 = vpack.c.b16 %v1198, %v1198
      %v1263 = vpack.c.b16 %v1199, %v1199
      %v1264 = vpack.c.b16 %v1200, %v1200
      %vm1329 = vcmask 519168
      %1330 = vst.msk [vmem:[%s185] sm:$0xf] %vm1329, %v1201
      %1331 = vst.msk [vmem:[%s185 + $0x4] sm:$0xf] %vm1329, %v1202
      %1332 = vst.msk [vmem:[%s185 + $0x8] sm:$0xf] %vm1329, %v1203
      %1333 = vst.msk [vmem:[%s185 + $0xc] sm:$0xf] %vm1329, %v1204
      %1334 = vst.msk [vmem:[%s185 + $0x10] sm:$0xf] %vm1329, %v1205
      %1335 = vst.msk [vmem:[%s185 + $0x14] sm:$0xf] %vm1329, %v1206
      %1336 = vst.msk [vmem:[%s185 + $0x18] sm:$0xf] %vm1329, %v1207
      %1337 = vst.msk [vmem:[%s185 + $0x1c] sm:$0xf] %vm1329, %v1208
      %1338 = vst.msk [vmem:[%s185 + $0x20] sm:$0xf] %vm1329, %v1209
      %1339 = vst.msk [vmem:[%s185 + $0x24] sm:$0xf] %vm1329, %v1210
      %1340 = vst.msk [vmem:[%s185 + $0x28] sm:$0xf] %vm1329, %v1211
      %1341 = vst.msk [vmem:[%s185 + $0x2c] sm:$0xf] %vm1329, %v1212
      %1342 = vst.msk [vmem:[%s185 + $0x30] sm:$0xf] %vm1329, %v1213
      %1343 = vst.msk [vmem:[%s185 + $0x34] sm:$0xf] %vm1329, %v1214
      %1344 = vst.msk [vmem:[%s185 + $0x38] sm:$0xf] %vm1329, %v1215
      %1345 = vst.msk [vmem:[%s185 + $0x3c] sm:$0xf] %vm1329, %v1216
      %1346 = vst.msk [vmem:[%s185 + $0x40] sm:$0xf] %vm1329, %v1217
      %1347 = vst.msk [vmem:[%s185 + $0x44] sm:$0xf] %vm1329, %v1218
      %1348 = vst.msk [vmem:[%s185 + $0x48] sm:$0xf] %vm1329, %v1219
      %1349 = vst.msk [vmem:[%s185 + $0x4c] sm:$0xf] %vm1329, %v1220
      %1350 = vst.msk [vmem:[%s185 + $0x50] sm:$0xf] %vm1329, %v1221
      %1351 = vst.msk [vmem:[%s185 + $0x54] sm:$0xf] %vm1329, %v1222
      %1352 = vst.msk [vmem:[%s185 + $0x58] sm:$0xf] %vm1329, %v1223
      %1353 = vst.msk [vmem:[%s185 + $0x5c] sm:$0xf] %vm1329, %v1224
      %1354 = vst.msk [vmem:[%s185 + $0x60] sm:$0xf] %vm1329, %v1225
      %1355 = vst.msk [vmem:[%s185 + $0x64] sm:$0xf] %vm1329, %v1226
      %1356 = vst.msk [vmem:[%s185 + $0x68] sm:$0xf] %vm1329, %v1227
      %1357 = vst.msk [vmem:[%s185 + $0x6c] sm:$0xf] %vm1329, %v1228
      %1358 = vst.msk [vmem:[%s185 + $0x70] sm:$0xf] %vm1329, %v1229
      %1359 = vst.msk [vmem:[%s185 + $0x74] sm:$0xf] %vm1329, %v1230
      %1360 = vst.msk [vmem:[%s185 + $0x78] sm:$0xf] %vm1329, %v1231
      %1361 = vst.msk [vmem:[%s185 + $0x7c] sm:$0xf] %vm1329, %v1232
      %1362 = vst.msk [vmem:[%s185 + $0x80] sm:$0xf] %vm1329, %v1233
      %1363 = vst.msk [vmem:[%s185 + $0x84] sm:$0xf] %vm1329, %v1234
      %1364 = vst.msk [vmem:[%s185 + $0x88] sm:$0xf] %vm1329, %v1235
      %1365 = vst.msk [vmem:[%s185 + $0x8c] sm:$0xf] %vm1329, %v1236
      %1366 = vst.msk [vmem:[%s185 + $0x90] sm:$0xf] %vm1329, %v1237
      %1367 = vst.msk [vmem:[%s185 + $0x94] sm:$0xf] %vm1329, %v1238
      %1368 = vst.msk [vmem:[%s185 + $0x98] sm:$0xf] %vm1329, %v1239
      %1369 = vst.msk [vmem:[%s185 + $0x9c] sm:$0xf] %vm1329, %v1240
      %1370 = vst.msk [vmem:[%s185 + $0xa0] sm:$0xf] %vm1329, %v1241
      %1371 = vst.msk [vmem:[%s185 + $0xa4] sm:$0xf] %vm1329, %v1242
      %1372 = vst.msk [vmem:[%s185 + $0xa8] sm:$0xf] %vm1329, %v1243
      %1373 = vst.msk [vmem:[%s185 + $0xac] sm:$0xf] %vm1329, %v1244
      %1374 = vst.msk [vmem:[%s185 + $0xb0] sm:$0xf] %vm1329, %v1245
      %1375 = vst.msk [vmem:[%s185 + $0xb4] sm:$0xf] %vm1329, %v1246
      %1376 = vst.msk [vmem:[%s185 + $0xb8] sm:$0xf] %vm1329, %v1247
      %1377 = vst.msk [vmem:[%s185 + $0xbc] sm:$0xf] %vm1329, %v1248
      %1378 = vst.msk [vmem:[%s185 + $0xc0] sm:$0xf] %vm1329, %v1249
      %1379 = vst.msk [vmem:[%s185 + $0xc4] sm:$0xf] %vm1329, %v1250
      %1380 = vst.msk [vmem:[%s185 + $0xc8] sm:$0xf] %vm1329, %v1251
      %1381 = vst.msk [vmem:[%s185 + $0xcc] sm:$0xf] %vm1329, %v1252
      %1382 = vst.msk [vmem:[%s185 + $0xd0] sm:$0xf] %vm1329, %v1253
      %1383 = vst.msk [vmem:[%s185 + $0xd4] sm:$0xf] %vm1329, %v1254
      %1384 = vst.msk [vmem:[%s185 + $0xd8] sm:$0xf] %vm1329, %v1255
      %1385 = vst.msk [vmem:[%s185 + $0xdc] sm:$0xf] %vm1329, %v1256
      %1386 = vst.msk [vmem:[%s185 + $0xe0] sm:$0xf] %vm1329, %v1257
      %1387 = vst.msk [vmem:[%s185 + $0xe4] sm:$0xf] %vm1329, %v1258
      %1388 = vst.msk [vmem:[%s185 + $0xe8] sm:$0xf] %vm1329, %v1259
      %1389 = vst.msk [vmem:[%s185 + $0xec] sm:$0xf] %vm1329, %v1260
      %1390 = vst.msk [vmem:[%s185 + $0xf0] sm:$0xf] %vm1329, %v1261
      %1391 = vst.msk [vmem:[%s185 + $0xf4] sm:$0xf] %vm1329, %v1262
      %1392 = vst.msk [vmem:[%s185 + $0xf8] sm:$0xf] %vm1329, %v1263
      %1393 = vst.msk [vmem:[%s185 + $0xfc] sm:$0xf] %vm1329, %v1264
      %s1394 = smul.u32 64, %s17
      %p1395 = scmp.lt.s32.totalorder %s1394, 255
      %s1396 = scalar_select %p1395, %s1394, 255
      %p1397 = scmp.lt.s32.totalorder %s18, 0
      %s1398 = scalar_select %p1397, %s18, 0
      %s1399 = sadd.s32 %s1398, %s1396
      %s1400 = smul.addr %s1399, 4
      %s1401 = scalar_lea.vmem %s2, %s1400
      // Predicated region
      $region29: #{tpu_custom_call.1} parent=27 // pred_check
        %p1402 = pneg %p97
      $region30: #{tpu_custom_call.1} parent=27 // pred_check_branch
        %1404 = sbr.rel (%p1402) target = $region32
      $region31: #{tpu_custom_call.1} parent=27 // pred_region
        %s1405 = smul.u32 64, %s17
      $region32: #{tpu_custom_call.1} parent=27 // pred_fallthru
        _
    $region28: #{tpu_custom_call.1} parent=5 // pred_fallthru
      _
    %p1406 = scmp.le.s32.totalorder 2, %s8
    // Predicated region
    $region33: #{tpu_custom_call.1} parent=5 // pred_check
      %p1407 = pneg %p1406
    $region34: #{tpu_custom_call.1} parent=5 // pred_check_branch
      %1409 = sbr.rel (%p1407) target = $region36
    $region35: #{tpu_custom_call.1} parent=5 // pred_region
      %s1410 = ssub.s32 %s8, 2
      // Predicated region
      $region37: #{tpu_custom_call.1} parent=35 // pred_check
        %p1411 = pneg %p103
      $region38: #{tpu_custom_call.1} parent=35 // pred_check_branch
        %1413 = sbr.rel (%p1411) target = $region40
      $region39: #{tpu_custom_call.1} parent=35 // pred_region
        %s1414 = smul.u32 64, %s19
        %p1415 = scmp.lt.s32.totalorder %s1414, 255
        %s1416 = scalar_select %p1415, %s1414, 255
        %p1417 = scmp.lt.s32.totalorder %s20, 0
        %s1418 = scalar_select %p1417, %s20, 0
        %s1419 = sadd.s32 %s1418, %s1416
        %s1420 = smul.addr %s1419, 4
        %s1421 = scalar_lea.vmem %s2, %s1420
      $region40: #{tpu_custom_call.1} parent=35 // pred_fallthru
        _
    $region36: #{tpu_custom_call.1} parent=5 // pred_fallthru
      _
  $region6: #{tpu_custom_call.1} parent=0 // loop_footer
    %s12 = sadd.s32 1, %s8
  $region7: #{tpu_custom_call.1} parent=0 // loop_footer_branch
    %7 = sbr.rel target = $region3
  $region8: #{tpu_custom_call.1} parent=0 // loop_exit
    _

</llo_original>
